<compile_context>
chip_gen: v6e
topology: v6e:2x2x1
jax: 0.10.0
libtpu: 0.0.40
codegen_flags: <defaults>
</compile_context>

<pallas_src>
import functools

import jax
import jax.numpy as jnp
from jax import lax
from jax.experimental import pallas as pl
from jax.experimental.pallas import tpu as pltpu


_LANES = 128
_SUBLANES = 8
# Conservative per-element VMEM working estimate (double-buffered x/noise/out
# plus a few f32 temporaries) and a block budget that fits every generation
# (v7x: 64 MiB physical VMEM, 32 MiB scoped default).
_WORK_BYTES_PER_ELEM = 48
_VMEM_BLOCK_BUDGET = 24 * 1024 * 1024
_VMEM_LIMIT_BYTES = 48 * 1024 * 1024


def _cdiv(a, b):
    return -(-a // b)


# --------------------------------------------------------------------------
# Kernels
# --------------------------------------------------------------------------
def _gn_fused_kernel(x_ref, n_ref, o_ref, *, snr, n_elems):
    """Fast path: block = (TB, M, 128) = TB whole rows, one fused pass."""
    x = x_ref[...].astype(jnp.float32)
    nz = n_ref[...].astype(jnp.float32)

    inv_n = 1.0 / float(n_elems)
    inv_snr = 10.0 ** (-float(snr) / 10.0)

    def _row_sum(v):                                  # (TB, M, 128) -> (TB, 1, 1)
        s = jnp.sum(v, axis=2, keepdims=True)         # cross-lane reduce (XLU)
        return jnp.sum(s, axis=1, keepdims=True)      # cross-sublane reduce

    sum_n = _row_sum(nz)
    sum_n2 = _row_sum(nz * nz)
    sum_x2 = _row_sum(x * x)

    mean_n = sum_n * inv_n
    # sum((n - mean)^2) = sum(n^2) - N*mean^2 ; benign cancellation for randn noise.
    sum_dev_sq = sum_n2 - sum_n * mean_n
    noise_variance = sum_x2 * inv_n * inv_snr
    # scale = sqrt(var) / std  with unbiased (ddof=1) std, via rsqrt (EUP slot).
    # jnp.maximum guard only matters for zero-padded batch rows (-> scale = 0).
    # (n_elems == 1 is unguarded, matching torch.std's behaviour.)
    scale = jnp.sqrt(noise_variance * float(n_elems - 1)) * lax.rsqrt(
        jnp.maximum(sum_dev_sq, 1e-30))

    o_ref[...] = (x + scale * (nz - mean_n)).astype(o_ref.dtype)


def _gn_sums_kernel(x_ref, n_ref, sn_ref, sn2_ref, sx2_ref):
    """N-tiled path, pass 1: accumulate per-row sums over the N axis."""
    @pl.when(pl.program_id(1) == 0)
    def _():
        sn_ref[...] = jnp.zeros_like(sn_ref)
        sn2_ref[...] = jnp.zeros_like(sn2_ref)
        sx2_ref[...] = jnp.zeros_like(sx2_ref)

    x = x_ref[...].astype(jnp.float32)                # (1, TM, 128)
    nz = n_ref[...].astype(jnp.float32)

    def _blk_sum(v):                                  # (1, TM, 128) -> (1, 1, 1)
        s = jnp.sum(v, axis=2, keepdims=True)
        return jnp.sum(s, axis=1, keepdims=True)

    sn_ref[...] += _blk_sum(nz)
    sn2_ref[...] += _blk_sum(nz * nz)
    sx2_ref[...] += _blk_sum(x * x)


def _gn_apply_kernel(mean_ref, scale_ref, x_ref, n_ref, o_ref):
    """N-tiled path, pass 2: out = x + scale * (noise - mean)."""
    x = x_ref[...].astype(jnp.float32)
    nz = n_ref[...].astype(jnp.float32)
    o_ref[...] = (x + scale_ref[...] * (nz - mean_ref[...])).astype(o_ref.dtype)


# --------------------------------------------------------------------------
# Wrappers
# --------------------------------------------------------------------------
def _single_pass(x3, n3, snr, n_true, budget, out_dtype):
    b, m, _ = x3.shape
    row_bytes = m * _LANES * _WORK_BYTES_PER_ELEM
    tb_max = max(1, min(64, budget // row_bytes))
    # Keep >= 2 grid steps when possible so v7x's 2 TensorCores split the batch.
    nb = min(b, max(_cdiv(b, tb_max), min(b, 2)))
    tb = _cdiv(b, nb)
    b_pad = nb * tb
    if b_pad != b:
        # Zero-padded rows produce scale = 0 and are sliced off afterwards.
        x3 = jnp.pad(x3, ((0, b_pad - b), (0, 0), (0, 0)))
        n3 = jnp.pad(n3, ((0, b_pad - b), (0, 0), (0, 0)))

    spec = pl.BlockSpec((tb, m, _LANES), lambda i: (i, 0, 0))
    kernel = functools.partial(_gn_fused_kernel, snr=snr, n_elems=n_true)
    out = pl.pallas_call(
        kernel,
        out_shape=jax.ShapeDtypeStruct((b_pad, m, _LANES), out_dtype),
        grid_spec=pltpu.PrefetchScalarGridSpec(
            num_scalar_prefetch=0,
            grid=(nb,),
            in_specs=[spec, spec],
            out_specs=spec,
        ),
        compiler_params=pltpu.CompilerParams(
            dimension_semantics=("parallel",),
            vmem_limit_bytes=_VMEM_LIMIT_BYTES),
    )(x3, n3)
    return out[:b] if b_pad != b else out


def _two_pass(x3, n3, snr, n_true, budget, out_dtype):
    b, m, _ = x3.shape
    tile_bytes = _LANES * _WORK_BYTES_PER_ELEM
    tm_max = max(_SUBLANES, (budget // tile_bytes) // _SUBLANES * _SUBLANES)
    nk = _cdiv(m, tm_max)
    tm = _cdiv(_cdiv(m, nk), _SUBLANES) * _SUBLANES   # sublane-aligned N tile
    m_pad = nk * tm
    if m_pad != m:
        x3 = jnp.pad(x3, ((0, 0), (0, m_pad - m), (0, 0)))
        n3 = jnp.pad(n3, ((0, 0), (0, m_pad - m), (0, 0)))

    stat = jax.ShapeDtypeStruct((b, 1, 1), jnp.float32)
    stat_spec = pl.BlockSpec((1, 1, 1), lambda i, k: (i, 0, 0))
    data_spec = pl.BlockSpec((1, tm, _LANES), lambda i, k: (i, k, 0))

    sum_n, sum_n2, sum_x2 = pl.pallas_call(
        _gn_sums_kernel,
        out_shape=(stat, stat, stat),
        grid_spec=pltpu.PrefetchScalarGridSpec(
            num_scalar_prefetch=0,
            grid=(b, nk),
            in_specs=[data_spec, data_spec],
            out_specs=(stat_spec, stat_spec, stat_spec),
        ),
        compiler_params=pltpu.CompilerParams(
            dimension_semantics=("parallel", "arbitrary"),
            vmem_limit_bytes=_VMEM_LIMIT_BYTES),
    )(x3, n3)

    # Per-row scalar math (B elements) is glue; plain jnp is fine here.
    inv_n = 1.0 / float(n_true)
    mean = sum_n * inv_n
    sum_dev_sq = sum_n2 - sum_n * mean
    var = sum_x2 * inv_n * (10.0 ** (-float(snr) / 10.0))
    scale = jnp.sqrt(var * float(n_true - 1)) * lax.rsqrt(
        jnp.maximum(sum_dev_sq, 1e-30))

    out = pl.pallas_call(
        _gn_apply_kernel,
        out_shape=jax.ShapeDtypeStruct((b, m_pad, _LANES), out_dtype),
        grid_spec=pltpu.PrefetchScalarGridSpec(
            num_scalar_prefetch=0,
            grid=(b, nk),
            in_specs=[stat_spec, stat_spec, data_spec, data_spec],
            out_specs=data_spec,
        ),
        compiler_params=pltpu.CompilerParams(
            dimension_semantics=("parallel", "parallel"),
            vmem_limit_bytes=_VMEM_LIMIT_BYTES),
    )(mean, scale, x3, n3)
    return out[:, :m, :] if m_pad != m else out


def gaussian_noise_tu(x, noise, snr, *, vmem_block_budget=_VMEM_BLOCK_BUDGET):
    """x: (B, C, D, W, H); noise: same shape (pre-drawn standard normal)."""
    b, c, d, w, h = x.shape
    n = c * d * w * h
    out_dtype = x.dtype

    # Lane-dense layout: flatten to (B, N), pad N to a multiple of 128, view as
    # (B, M, 128). Zero padding does not perturb the sums (divisors use the
    # true N) and the padded lanes are sliced off at the end.
    n_pad = _cdiv(n, _LANES) * _LANES
    x2 = x.reshape(b, n)
    n2 = noise.reshape(b, n)
    if n_pad != n:
        x2 = jnp.pad(x2, ((0, 0), (0, n_pad - n)))
        n2 = jnp.pad(n2, ((0, 0), (0, n_pad - n)))
    m = n_pad // _LANES
    x3 = x2.reshape(b, m, _LANES)
    n3 = n2.reshape(b, m, _LANES)

    row_bytes = n_pad * _WORK_BYTES_PER_ELEM
    if row_bytes <= vmem_block_budget:
        out3 = _single_pass(x3, n3, float(snr), n, vmem_block_budget, out_dtype)
    else:
        # Row too big for a whole-row VMEM block (matters on v7x's 64 MiB VMEM):
        # N-tiled two-pass path.
        out3 = _two_pass(x3, n3, float(snr), n, vmem_block_budget, out_dtype)

    out = out3.reshape(b, n_pad)[:, :n]
    return out.reshape(b, c, d, w, h)


def gaussian_noise_tu_ref(x, noise, snr):
    """Pure-JAX reference mirroring the PyTorch loop."""
    b = x.shape[0]
    n = x[0].size
    outs = []
    for i in range(b):
        nb = noise[i] - jnp.mean(noise[i])
        sig_pow = jnp.sum(x[i] ** 2) / n
        var = sig_pow / (10.0 ** (snr / 10.0))
        std = jnp.std(nb, ddof=1)
        outs.append(x[i] + jnp.sqrt(var) / std * nb)
    return jnp.stack(outs, axis=0)


if __name__ == "__main__":
    key = jax.random.PRNGKey(0)
    kx, kn = jax.random.split(key)

    B, C, D, W, H = 2, 4, 8, 8, 8          # N = 2048 (multiple of 128)
    SNR = 10.0

    x = jax.random.normal(kx, (B, C, D, W, H), dtype=jnp.float32)
    # The torch module draws noise inside forward; we pre-draw it
    # deterministically so the kernel can be checked against a reference.
    noise = jax.random.normal(kn, (B, C, D, W, H), dtype=jnp.float32)

    ref = gaussian_noise_tu_ref(x, noise, SNR)

    # Fast path: fused single-pass kernel, whole rows per block.
    out = jax.block_until_ready(gaussian_noise_tu(x, noise, SNR))
    assert out.shape == (B, C, D, W, H) and out.dtype == x.dtype
    assert jnp.allclose(out, ref, atol=2e-5, rtol=2e-5)

    # Also exercise the N-tiled two-pass fallback (the path large volumes take
    # on v7x's smaller VMEM) by forcing a tiny block budget.
    out_tiled = jax.block_until_ready(
        gaussian_noise_tu(x, noise, SNR, vmem_block_budget=32 * 1024))
    assert jnp.allclose(out_tiled, ref, atol=2e-5, rtol=2e-5)

    print("KERNEL_OK")
</pallas_src>

<mosaic_0001>
module attributes {stable_mosaic.version = 11 : i64} {
  func.func @_gn_fused_kernel(%arg0: i32, %arg1: memref<1x16x128xf32, #tpu.memory_space<vmem>>, %arg2: memref<1x16x128xf32, #tpu.memory_space<vmem>>, %arg3: memref<1x16x128xf32, #tpu.memory_space<vmem>>) attributes {dimension_semantics = [#tpu.dimension_semantics<parallel>], iteration_bounds = array<i64: 2>, scalar_prefetch = 0 : i64, scratch_operands = 0 : i64, tpu.core_type = #tpu.core_type<tc>, window_params = [{transform_indices = @transform_0, window_bounds = array<i64: 1, 16, 128>}, {transform_indices = @transform_1, window_bounds = array<i64: 1, 16, 128>}, {transform_indices = @transform_2, window_bounds = array<i64: 1, 16, 128>}]} {
    %c0 = arith.constant 0 : index
    %c0_0 = arith.constant 0 : index
    %c0_1 = arith.constant 0 : index
    %0 = vector.load %arg1[%c0, %c0_0, %c0_1] : memref<1x16x128xf32, #tpu.memory_space<vmem>>, vector<1x16x128xf32>
    %c0_2 = arith.constant 0 : index
    %c0_3 = arith.constant 0 : index
    %c0_4 = arith.constant 0 : index
    %1 = vector.load %arg2[%c0_2, %c0_3, %c0_4] : memref<1x16x128xf32, #tpu.memory_space<vmem>>, vector<1x16x128xf32>
    %cst = arith.constant dense<0.000000e+00> : vector<1x16xf32>
    %2 = vector.multi_reduction <add>, %1, %cst [2] : vector<1x16x128xf32> to vector<1x16xf32>
    %3 = vector.shape_cast %2 : vector<1x16xf32> to vector<1x16x1xf32>
    %cst_5 = arith.constant dense<0.000000e+00> : vector<1x1xf32>
    %4 = vector.multi_reduction <add>, %3, %cst_5 [1] : vector<1x16x1xf32> to vector<1x1xf32>
    %5 = vector.shape_cast %4 : vector<1x1xf32> to vector<1x1x1xf32>
    %6 = arith.mulf %1, %1 : vector<1x16x128xf32>
    %cst_6 = arith.constant dense<0.000000e+00> : vector<1x16xf32>
    %7 = vector.multi_reduction <add>, %6, %cst_6 [2] : vector<1x16x128xf32> to vector<1x16xf32>
    %8 = vector.shape_cast %7 : vector<1x16xf32> to vector<1x16x1xf32>
    %cst_7 = arith.constant dense<0.000000e+00> : vector<1x1xf32>
    %9 = vector.multi_reduction <add>, %8, %cst_7 [1] : vector<1x16x1xf32> to vector<1x1xf32>
    %10 = vector.shape_cast %9 : vector<1x1xf32> to vector<1x1x1xf32>
    %11 = arith.mulf %0, %0 : vector<1x16x128xf32>
    %cst_8 = arith.constant dense<0.000000e+00> : vector<1x16xf32>
    %12 = vector.multi_reduction <add>, %11, %cst_8 [2] : vector<1x16x128xf32> to vector<1x16xf32>
    %13 = vector.shape_cast %12 : vector<1x16xf32> to vector<1x16x1xf32>
    %cst_9 = arith.constant dense<0.000000e+00> : vector<1x1xf32>
    %14 = vector.multi_reduction <add>, %13, %cst_9 [1] : vector<1x16x1xf32> to vector<1x1xf32>
    %15 = vector.shape_cast %14 : vector<1x1xf32> to vector<1x1x1xf32>
    %cst_10 = arith.constant 4.8828125E-4 : f32
    %16 = vector.broadcast %cst_10 : f32 to vector<1x1x1xf32>
    %17 = arith.mulf %5, %16 : vector<1x1x1xf32>
    %18 = arith.mulf %5, %17 : vector<1x1x1xf32>
    %19 = arith.subf %10, %18 : vector<1x1x1xf32>
    %cst_11 = arith.constant 4.8828125E-4 : f32
    %20 = vector.broadcast %cst_11 : f32 to vector<1x1x1xf32>
    %21 = arith.mulf %15, %20 : vector<1x1x1xf32>
    %cst_12 = arith.constant 1.000000e-01 : f32
    %22 = vector.broadcast %cst_12 : f32 to vector<1x1x1xf32>
    %23 = arith.mulf %21, %22 : vector<1x1x1xf32>
    %cst_13 = arith.constant 2.047000e+03 : f32
    %24 = vector.broadcast %cst_13 : f32 to vector<1x1x1xf32>
    %25 = arith.mulf %23, %24 : vector<1x1x1xf32>
    %26 = math.sqrt %25 : vector<1x1x1xf32>
    %cst_14 = arith.constant 1.000000e-30 : f32
    %27 = vector.broadcast %cst_14 : f32 to vector<1x1x1xf32>
    %28 = arith.maximumf %19, %27 : vector<1x1x1xf32>
    %29 = math.rsqrt %28 : vector<1x1x1xf32>
    %30 = arith.mulf %26, %29 : vector<1x1x1xf32>
    %31 = vector.broadcast %17 : vector<1x1x1xf32> to vector<1x16x128xf32>
    %32 = arith.subf %1, %31 : vector<1x16x128xf32>
    %33 = vector.broadcast %30 : vector<1x1x1xf32> to vector<1x16x128xf32>
    %34 = arith.mulf %33, %32 : vector<1x16x128xf32>
    %35 = arith.addf %0, %34 : vector<1x16x128xf32>
    %c0_15 = arith.constant 0 : index
    %c0_16 = arith.constant 0 : index
    %c0_17 = arith.constant 0 : index
    %36 = vector.load %arg3[%c0_15, %c0_16, %c0_17] : memref<1x16x128xf32, #tpu.memory_space<vmem>>, vector<1x16x128xf32>
    tpu.vector_store %arg3[%c0_15, %c0_16, %c0_17], %35 {strides = array<i32>} : memref<1x16x128xf32, #tpu.memory_space<vmem>>, vector<1x16x128xf32>,
    return
  }
  func.func @transform_0(%arg0: i32) -> (i32, i32, i32) {
    %c0_i32 = arith.constant 0 : i32
    %c0_i32_0 = arith.constant 0 : i32
    %c0_i32_1 = arith.constant 0 : i32
    return %arg0, %c0_i32, %c0_i32_0 : i32, i32, i32
  }
  func.func @transform_1(%arg0: i32) -> (i32, i32, i32) {
    %c0_i32 = arith.constant 0 : i32
    %c0_i32_0 = arith.constant 0 : i32
    %c0_i32_1 = arith.constant 0 : i32
    return %arg0, %c0_i32, %c0_i32_0 : i32, i32, i32
  }
  func.func @transform_2(%arg0: i32) -> (i32, i32, i32) {
    %c0_i32 = arith.constant 0 : i32
    %c0_i32_0 = arith.constant 0 : i32
    %c0_i32_1 = arith.constant 0 : i32
    return %arg0, %c0_i32, %c0_i32_0 : i32, i32, i32
  }
}

</mosaic_0001>

<llo_original>
// kernel: tpu_custom_call.1
$region0: #{tpu_custom_call.1}
  #allocation0 [shape = 'u32[]', space=smem, size = 0x4, offset = 0x4, fixed_abs, tag = 'smem constant byte address 0x4 - core index']
  #allocation1 [shape = 'u32[144,128]{1,0:T(1,128)}', space=vmem, size = 0x12000, scoped, tag = 'internal scratch']
  %s0 = inlined_call_operand.hbm [shape: f32[2,16,128], index: 0, kind: input, shape index: {}]
  %s1 = inlined_call_operand.hbm [shape: f32[2,16,128], index: 1, kind: input, shape index: {}]
  %s2 = inlined_call_operand.hbm [shape: f32[2,16,128], index: 2, kind: output, shape index: {}]
  %s3 = sld [smem:[#allocation0]]
  $region49: #{tpu_custom_call.1} parent=0
    _
  %s5 = ssub.s32 1, %s3
  %s6 = scalar_select 0, %s5, %s3
  $region1: #{tpu_custom_call.1} parent=0
    #allocation2 [shape = 'u8[16384]{0}', space=vmem, size = 0x4000, scoped, tag = 'input window, operand 0']
    #allocation3 [shape = 's32[2]{0}', space=sflag, size = 0x8, scoped, tag = 'scoped memory for tpu_custom_call.1']
    #allocation4 [shape = 's32[2]{0}', space=sflag, size = 0x8, scoped, tag = 'scoped memory for tpu_custom_call.1']
    #allocation5 [shape = 'u8[16384]{0}', space=vmem, size = 0x4000, scoped, tag = 'input window, operand 1']
    #allocation6 [shape = 's32[2]{0}', space=sflag, size = 0x8, scoped, tag = 'scoped memory for tpu_custom_call.1']
    #allocation7 [shape = 'u8[16384]{0}', space=vmem, size = 0x4000, scoped, tag = 'output window, operand 0']
    %7 = vsyncpa [#allocation3], 0
    %s8 = scalar_lea.sflag [#allocation3], 1
    %9 = vsyncpa %s8, 0
    %10 = vsyncpa [#allocation6], 0
    %s11 = scalar_lea.sflag [#allocation6], 1
    %12 = vsyncpa %s11, 0
    %13 = vsyncpa [#allocation4], 0
    %s14 = scalar_lea.sflag [#allocation4], 1
    %15 = vsyncpa %s14, 0
    loop: start=0, step=1, limit=4
    $region2: #{tpu_custom_call.1} parent=1 // loop_pre_header
      _
    $region3: #{tpu_custom_call.1} parent=1 // loop_header
      %s17 = sphi 0, %s21
      %p18 = scmp.ge.s32.totalorder %s17, 4
      %s27 = sphi 0, %s29
      %s30 = sphi 0, %s27
      %s31 = sphi 0, %s30
      %s47 = sphi 0, %s31
      %s53 = sphi 0, %s55
      %s56 = sphi 0, %s53
      %s57 = sphi 0, %s56
      %s73 = sphi 0, %s57
      %s79 = sphi 0, %s81
      %s82 = sphi 0, %s79
      %s83 = sphi 0, %s82
      %s99 = sphi 0, %s83
    $region4: #{tpu_custom_call.1} parent=1 // loop_header_branch
      %20 = sbr.rel (%p18) target = $region8
    $region5: #{tpu_custom_call.1} parent=1 // loop_body
      %s22 = ssub.s32 %s17, 1
      %s23 = ssub.s32 %s17, 2
      %s24 = sadd.s32 %s17, 1
      %s25 = ssub.s32 %s17, %s24
      %p26 = scmp.eq.s32.totalorder %s25, 0
      %s28 = sadd.s32 %s27, 1
      %s29 = scalar_select %p26, %s27, %s28
      %p32 = pneg %p26
      %p33 = scmp.eq.s32.totalorder %s17, 1
      %p34 = por %p32, %p33
      %p35 = scmp.ne.s32.totalorder %s27, %s30
      %p36 = scmp.eq.s32.totalorder %s17, 0
      %p37 = por %p35, %p36
      %p38 = scmp.ne.s32.totalorder %s27, %s30
      %p39 = scmp.eq.s32.totalorder %s22, 1
      %p40 = por %p38, %p39
      %p41 = scmp.ne.s32.totalorder %s30, %s31
      %p42 = scmp.eq.s32.totalorder %s22, 0
      %p43 = por %p41, %p42
      %p44 = scmp.ne.s32.totalorder %s30, %s31
      %p45 = scmp.eq.s32.totalorder %s23, 1
      %p46 = por %p44, %p45
      %p48 = scmp.ne.s32.totalorder %s31, %s47
      %p49 = scmp.eq.s32.totalorder %s23, 0
      %p50 = por %p48, %p49
      %s51 = ssub.s32 %s17, %s24
      %p52 = scmp.eq.s32.totalorder %s51, 0
      %s54 = sadd.s32 %s53, 1
      %s55 = scalar_select %p52, %s53, %s54
      %p58 = pneg %p52
      %p59 = scmp.eq.s32.totalorder %s17, 1
      %p60 = por %p58, %p59
      %p61 = scmp.ne.s32.totalorder %s53, %s56
      %p62 = scmp.eq.s32.totalorder %s17, 0
      %p63 = por %p61, %p62
      %p64 = scmp.ne.s32.totalorder %s53, %s56
      %p65 = scmp.eq.s32.totalorder %s22, 1
      %p66 = por %p64, %p65
      %p67 = scmp.ne.s32.totalorder %s56, %s57
      %p68 = scmp.eq.s32.totalorder %s22, 0
      %p69 = por %p67, %p68
      %p70 = scmp.ne.s32.totalorder %s56, %s57
      %p71 = scmp.eq.s32.totalorder %s23, 1
      %p72 = por %p70, %p71
      %p74 = scmp.ne.s32.totalorder %s57, %s73
      %p75 = scmp.eq.s32.totalorder %s23, 0
      %p76 = por %p74, %p75
      %s77 = ssub.s32 %s17, %s24
      %p78 = scmp.eq.s32.totalorder %s77, 0
      %s80 = sadd.s32 %s79, 1
      %s81 = scalar_select %p78, %s79, %s80
      %p84 = pneg %p78
      %p85 = scmp.eq.s32.totalorder %s17, 1
      %p86 = por %p84, %p85
      %p87 = scmp.ne.s32.totalorder %s79, %s82
      %p88 = scmp.eq.s32.totalorder %s17, 0
      %p89 = por %p87, %p88
      %p90 = scmp.ne.s32.totalorder %s79, %s82
      %p91 = scmp.eq.s32.totalorder %s22, 1
      %p92 = por %p90, %p91
      %p93 = scmp.ne.s32.totalorder %s82, %s83
      %p94 = scmp.eq.s32.totalorder %s22, 0
      %p95 = por %p93, %p94
      %p96 = scmp.ne.s32.totalorder %s82, %s83
      %p97 = scmp.eq.s32.totalorder %s23, 1
      %p98 = por %p96, %p97
      %p100 = scmp.ne.s32.totalorder %s83, %s99
      %p101 = scmp.eq.s32.totalorder %s23, 0
      %p102 = por %p100, %p101
      %p103 = scmp.le.s32.totalorder 1, %s17
      %p104 = scmp.lt.s32.totalorder %s17, 3
      %p105 = pnand %p103, %p104
      %p106 = pneg %p105
      // Predicated region
      $region9: #{tpu_custom_call.1} parent=5 // pred_check
        _
      $region10: #{tpu_custom_call.1} parent=5 // pred_check_branch
        %108 = sbr.rel (%p105) target = $region12
      $region11: #{tpu_custom_call.1} parent=5 // pred_region
        %s109 = ssub.s32 %s17, 1
      $region12: #{tpu_custom_call.1} parent=5 // pred_fallthru
        _
      %p110 = scmp.lt.s32.totalorder %s17, 2
      // Predicated region
      $region13: #{tpu_custom_call.1} parent=5 // pred_check
        %p111 = pneg %p110
      $region14: #{tpu_custom_call.1} parent=5 // pred_check_branch
        %113 = sbr.rel (%p111) target = $region16
      $region15: #{tpu_custom_call.1} parent=5 // pred_region
        // Predicated region
        $region17: #{tpu_custom_call.1} parent=15 // pred_check
          %p114 = pneg %p37
        $region18: #{tpu_custom_call.1} parent=15 // pred_check_branch
          %116 = sbr.rel (%p114) target = $region20
        $region19: #{tpu_custom_call.1} parent=15 // pred_region
          %s117 = sand.u32 %s27, 1
          %s118 = scalar_lea.sflag [#allocation3], %s117
          %s119 = sand.u32 %s27, 1
          %s120 = smul.addr %s119, 16
          %s121 = scalar_lea.vmem [#allocation2], %s120
          %s123 = ssub.s32 256, 256
          %124 = vsyncadd %s118, %s123
          %s125 = smul.addr %s17, 2
          %s126 = smul.addr %s125, 128
          %s127 = scalar_lea.hbm %s0, %s126
          %s128 = sshll.u32 %s121, 4
          %s129 = int_to_ptr.vmem [resolvable:$true] %s128
          %134 = dma.hbm_to_vmem [thread:$0]  %s127, 256, %s129, %s118, 128, 128, 8
        $region20: #{tpu_custom_call.1} parent=15 // pred_fallthru
          _
        // Predicated region
        $region21: #{tpu_custom_call.1} parent=15 // pred_check
          %p135 = pneg %p63
        $region22: #{tpu_custom_call.1} parent=15 // pred_check_branch
          %137 = sbr.rel (%p135) target = $region24
        $region23: #{tpu_custom_call.1} parent=15 // pred_region
          %s138 = sand.u32 %s53, 1
          %s139 = scalar_lea.sflag [#allocation6], %s138
          %s140 = sand.u32 %s53, 1
          %s141 = smul.addr %s140, 16
          %s142 = scalar_lea.vmem [#allocation5], %s141
          %s144 = ssub.s32 256, 256
          %145 = vsyncadd %s139, %s144
          %s146 = smul.addr %s17, 2
          %s147 = smul.addr %s146, 128
          %s148 = scalar_lea.hbm %s1, %s147
          %s149 = sshll.u32 %s142, 4
          %s150 = int_to_ptr.vmem [resolvable:$true] %s149
          %155 = dma.hbm_to_vmem [thread:$0]  %s148, 256, %s150, %s139, 128, 128, 8
        $region24: #{tpu_custom_call.1} parent=15 // pred_fallthru
          _
      $region16: #{tpu_custom_call.1} parent=5 // pred_fallthru
        _
      %p156 = scmp.le.s32.totalorder 1, %s17
      %p157 = scmp.lt.s32.totalorder %s17, 3
      %p158 = pnand %p156, %p157
      %p159 = pneg %p158
      // Predicated region
      $region25: #{tpu_custom_call.1} parent=5 // pred_check
        _
      $region26: #{tpu_custom_call.1} parent=5 // pred_check_branch
        %161 = sbr.rel (%p158) target = $region28
      $region27: #{tpu_custom_call.1} parent=5 // pred_region
        %s162 = ssub.s32 %s17, 1
        %s163 = sand.u32 %s30, 1
        %s164 = scalar_lea.sflag [#allocation3], %s163
        %s165 = sand.u32 %s30, 1
        %s166 = smul.addr %s165, 16
        %s167 = scalar_lea.vmem [#allocation2], %s166
        // Predicated region
        $region29: #{tpu_custom_call.1} parent=27 // pred_check
          %p168 = pneg %p43
        $region30: #{tpu_custom_call.1} parent=27 // pred_check_branch
          %170 = sbr.rel (%p168) target = $region32
        $region31: #{tpu_custom_call.1} parent=27 // pred_region
          %171 = dma.done %s164, 256
        $region32: #{tpu_custom_call.1} parent=27 // pred_fallthru
          _
        %s172 = sand.u32 %s56, 1
        %s173 = scalar_lea.sflag [#allocation6], %s172
        %s174 = sand.u32 %s56, 1
        %s175 = smul.addr %s174, 16
        %s176 = scalar_lea.vmem [#allocation5], %s175
        // Predicated region
        $region33: #{tpu_custom_call.1} parent=27 // pred_check
          %p177 = pneg %p69
        $region34: #{tpu_custom_call.1} parent=27 // pred_check_branch
          %179 = sbr.rel (%p177) target = $region36
        $region35: #{tpu_custom_call.1} parent=27 // pred_region
          %180 = dma.done %s173, 256
        $region36: #{tpu_custom_call.1} parent=27 // pred_fallthru
          _
        %s181 = sand.u32 %s30, 1
        %s182 = scalar_lea.sflag [#allocation3], %s181
        %s183 = sand.u32 %s30, 1
        %s184 = smul.addr %s183, 16
        %s185 = scalar_lea.vmem [#allocation2], %s184
        %p186 = pneg %p43
        %p187 = pneg %p40
        %s188 = sand.u32 %s56, 1
        %s189 = scalar_lea.sflag [#allocation6], %s188
        %s190 = sand.u32 %s56, 1
        %s191 = smul.addr %s190, 16
        %s192 = scalar_lea.vmem [#allocation5], %s191
        %p193 = pneg %p69
        %p194 = pneg %p66
        %p195 = pneg %p95
        %p196 = pneg %p92
        %s197 = sand.u32 %s82, 1
        %s198 = scalar_lea.sflag [#allocation4], %s197
        %s199 = sand.u32 %s82, 1
        %s200 = smul.addr %s199, 16
        %s201 = scalar_lea.vmem [#allocation7], %s200
        %v202 = vld [vmem:[%s167] sm:$0xff]
        %v203 = vld [vmem:[%s167 + $0x8] sm:$0xff]
        %v204 = vld [vmem:[%s176] sm:$0xff]
        %v205 = vld [vmem:[%s176 + $0x8] sm:$0xff]
        %206 = vadd.xlane.f32.xlu0 %v204
        %v207 = vpop.xlane.xlu0 %206
        %208 = vadd.xlane.f32.xlu0 %v205
        %v209 = vpop.xlane.xlu0 %208
        %v210 = vadd.f32 %v207, %v209
        %v211 = vrot.slane %v210, 4
        %v212 = vadd.f32 %v210, %v211
        %v213 = vrot.slane %v212, 2
        %v214 = vadd.f32 %v212, %v213
        %v215 = vrot.slane %v214, 1
        %v216 = vadd.f32 %v214, %v215
        %v217 = vmul.f32 %v204, %v204
        %v218 = vmul.f32 %v205, %v205
        %219 = vadd.xlane.f32.xlu0 %v217
        %v220 = vpop.xlane.xlu0 %219
        %221 = vadd.xlane.f32.xlu0 %v218
        %v222 = vpop.xlane.xlu0 %221
        %v223 = vadd.f32 %v220, %v222
        %v224 = vrot.slane %v223, 4
        %v225 = vadd.f32 %v223, %v224
        %v226 = vrot.slane %v225, 2
        %v227 = vadd.f32 %v225, %v226
        %v228 = vrot.slane %v227, 1
        %v229 = vadd.f32 %v227, %v228
        %v230 = vmul.f32 %v202, %v202
        %v231 = vmul.f32 %v203, %v203
        %232 = vadd.xlane.f32.xlu0 %v230
        %v233 = vpop.xlane.xlu0 %232
        %234 = vadd.xlane.f32.xlu0 %v231
        %v235 = vpop.xlane.xlu0 %234
        %v236 = vadd.f32 %v233, %v235
        %v237 = vrot.slane %v236, 4
        %v238 = vadd.f32 %v236, %v237
        %v239 = vrot.slane %v238, 2
        %v240 = vadd.f32 %v238, %v239
        %v241 = vrot.slane %v240, 1
        %v242 = vadd.f32 %v240, %v241
        %v243 = vmul.f32 %v216, 0.00048828125
        %v244 = vmul.f32 %v216, %v243
        %v245 = vsub.f32 %v229, %v244
        %v246 = vmul.f32 %v242, 0.00048828125
        %v247 = vmul.f32 %v246, 0.1
        %v248 = vmul.f32 %v247, 2047.0
        %v249 = vrsqrt.pop %v248
        %v250 = vmul.f32 %v248, %v249
        %vm251 = vcmp.eq.f32.partialorder %v248, inf
        %v252 = vsel %vm251, %v248, %v250
        %vm253 = vcmp.eq.f32.partialorder %v248, 0.0
        %v254 = vand.u32 %v248, 2147483648
        %v255 = vsel %vm253, %v254, %v252
        %v256 = vmax.f32 %v245, 1e-30
        %v257 = vrsqrt.pop %v256
        %v258 = vmul.f32 %v255, %v257
        %v259 = vsub.f32 %v204, %v243
        %v260 = vsub.f32 %v205, %v243
        %v261 = vmul.f32 %v258, %v259
        %v262 = vmul.f32 %v258, %v260
        %v263 = vadd.f32 %v202, %v261
        %v264 = vadd.f32 %v203, %v262
        %265 = vst [vmem:[%s201] sm:$0xff] %v263
        %266 = vst [vmem:[%s201 + $0x8] sm:$0xff] %v264
        %s267 = sand.u32 %s82, 1
        %s268 = scalar_lea.sflag [#allocation4], %s267
        %s269 = sand.u32 %s82, 1
        %s270 = smul.addr %s269, 16
        %s271 = scalar_lea.vmem [#allocation7], %s270
        // Predicated region
        $region37: #{tpu_custom_call.1} parent=27 // pred_check
          %p272 = pneg %p92
        $region38: #{tpu_custom_call.1} parent=27 // pred_check_branch
          %274 = sbr.rel (%p272) target = $region40
        $region39: #{tpu_custom_call.1} parent=27 // pred_region
          %s276 = ssub.s32 256, 256
          %277 = vsyncadd %s268, %s276
          %s278 = smul.addr %s22, 2
          %s279 = smul.addr %s278, 128
          %s280 = scalar_lea.hbm %s2, %s279
          %s281 = sshll.u32 %s271, 4
          %s282 = int_to_ptr.vmem [resolvable:$true] %s281
          %287 = dma.vmem_to_hbm [thread:$0]  %s282, 256, %s280, %s268, 128, 128, 8
        $region40: #{tpu_custom_call.1} parent=27 // pred_fallthru
          _
      $region28: #{tpu_custom_call.1} parent=5 // pred_fallthru
        _
      %p288 = scmp.le.s32.totalorder 2, %s17
      // Predicated region
      $region41: #{tpu_custom_call.1} parent=5 // pred_check
        %p289 = pneg %p288
      $region42: #{tpu_custom_call.1} parent=5 // pred_check_branch
        %291 = sbr.rel (%p289) target = $region44
      $region43: #{tpu_custom_call.1} parent=5 // pred_region
        %s292 = ssub.s32 %s17, 2
        // Predicated region
        $region45: #{tpu_custom_call.1} parent=43 // pred_check
          %p293 = pneg %p98
        $region46: #{tpu_custom_call.1} parent=43 // pred_check_branch
          %295 = sbr.rel (%p293) target = $region48
        $region47: #{tpu_custom_call.1} parent=43 // pred_region
          %s296 = sand.u32 %s83, 1
          %s297 = scalar_lea.sflag [#allocation4], %s296
          %s298 = sand.u32 %s83, 1
          %s299 = smul.addr %s298, 16
          %s300 = scalar_lea.vmem [#allocation7], %s299
          %301 = dma.done %s297, 256
        $region48: #{tpu_custom_call.1} parent=43 // pred_fallthru
          _
      $region44: #{tpu_custom_call.1} parent=5 // pred_fallthru
        _
    $region6: #{tpu_custom_call.1} parent=1 // loop_footer
      %s21 = sadd.s32 1, %s17
    $region7: #{tpu_custom_call.1} parent=1 // loop_footer_branch
      %16 = sbr.rel target = $region3
    $region8: #{tpu_custom_call.1} parent=1 // loop_exit
      _
    %302 = vsyncpa [#allocation3], 1
    %s303 = scalar_lea.sflag [#allocation3], 1
    %304 = vsyncpa %s303, 1
    %305 = vsyncpa [#allocation6], 1
    %s306 = scalar_lea.sflag [#allocation6], 1
    %307 = vsyncpa %s306, 1
    %308 = vsyncpa [#allocation4], 1
    %s309 = scalar_lea.sflag [#allocation4], 1
    %310 = vsyncpa %s309, 1

</llo_original>
